<compile_context>
chip_gen: v7x
topology: tpu7x:2x2x1
jax: 0.10.0
libtpu: 0.0.40
codegen_flags: <defaults>
</compile_context>

<pallas_src>
import jax
import jax.numpy as jnp
import numpy as np
from jax.experimental import pallas as pl
from jax.experimental.pallas import tpu as pltpu

NF = 5            # in_features == out_features == 5
SUB = 8           # sublane tile
LANES = 128       # lane tile
N_STEPS = 7       # number of fc applications
N_BANDS = 17      # 5 (W^T) + 1 (b0) + 5 (2W^T, shared) + 6 (folded biases)
P_ROWS = N_BANDS * SUB          # 136 rows, multiple of 8
BETAS = (3.0, 3.0, 2.0, 3.0, 2.0, 3.0)   # folded affine offsets between fcs


def _kernel(x_ref, p_ref, o_ref):
    def band(i):                                   # contiguous, tile-aligned vld
        return p_ref[i * SUB:(i + 1) * SUB, :]

    def fc(s, w, bias):
        # y[i, j] = bias[j] + sum_k s[i, k] * W[j, k]
        # 5 lane-broadcast MACs on the VPU; tree-reduced (add depth 3, not 6).
        t = [s[:, k:k + 1] * w[k] for k in range(NF)]
        return (bias + t[0]) + ((t[1] + t[2]) + (t[3] + t[4]))

    w1 = [band(j) for j in range(NF)]              # step-0 weights  (W^T rows)
    w2 = [band(NF + 1 + j) for j in range(NF)]     # shared 2W^T rows, hoisted
    s = fc(x_ref[...], w1, band(NF))               # step 0: W, b
    for k in range(6):                             # steps 1..6: 2W, folded bias
        s = fc(s, w2, band(2 * NF + 1 + k))
    o_ref[...] = s                                 # lane-dense (8,128) store


def pack_params(fc_w, fc_b):
    """One-time packing of the shared fc parameters (with the interleaved
    elementwise ops folded in) into pre-replicated 8-row bands."""
    W = np.asarray(fc_w, np.float32)
    b = np.asarray(fc_b, np.float32)
    r = W.sum(axis=1)                              # (ones @ W^T)[j] = sum_k W[j,k]
    slab = np.zeros((P_ROWS, LANES), np.float32)

    def set_band(i, vec5):                         # replicate across 8 sublanes
        slab[i * SUB:(i + 1) * SUB, :NF] = vec5

    WT, WT2 = W.T, (2.0 * W).T
    for j in range(NF):
        set_band(j, WT[j])                         # bands 0..4 : W^T rows
        set_band(NF + 1 + j, WT2[j])               # bands 6..10: (2W)^T rows
    set_band(NF, b)                                # band 5     : b
    for k, beta in enumerate(BETAS):               # bands 11..16: folded biases
        set_band(2 * NF + 1 + k, b + beta * r)
    return jnp.asarray(slab)


def forward_pallas_batched(xb, param_slab):
    """xb: (B, 5, 5) -> (B, 5, 5). Batch axis on the grid; weights resident."""
    B = xb.shape[0]
    x2d = (jnp.zeros((B, SUB, LANES), jnp.float32)
           .at[:, :NF, :NF].set(xb.astype(jnp.float32))
           .reshape(B * SUB, LANES))
    out = pl.pallas_call(
        _kernel,
        out_shape=jax.ShapeDtypeStruct((B * SUB, LANES), jnp.float32),
        grid=(B,),
        in_specs=[pl.BlockSpec((SUB, LANES), lambda i: (i, 0)),      # x tile
                  pl.BlockSpec((P_ROWS, LANES), lambda i: (0, 0))],  # params, resident
        out_specs=pl.BlockSpec((SUB, LANES), lambda i: (i, 0)),
        compiler_params=pltpu.CompilerParams(
            dimension_semantics=("parallel",)),      # 2-TC split on v7x
    )(x2d, param_slab)
    return out.reshape(B, SUB, LANES)[:, :NF, :NF]


def forward_pallas(x, param_slab):
    """Single (5,5) input, like the PyTorch module."""
    return forward_pallas_batched(x[None], param_slab)[0]


def forward_ref(x, fc_w, fc_b):
    """Pure-JAX reference matching the PyTorch forward."""
    def fc(t):
        return t @ fc_w.T + fc_b
    t = fc(x); t = t + 1.0; t = t * 2.0 + 1.0
    t = fc(t); t = t + 1.0; t = t * 2.0 + 1.0
    t = fc(t); t = t + 1.0; t = t * 2.0
    t = fc(t); t = t + 1.0; t = t * 2.0 + 1.0
    t = fc(t); t = t + 1.0; t = t * 2.0
    t = fc(t); t = t * 2.0; t = t + 3.0
    t = fc(t)
    return t


if __name__ == "__main__":
    key = jax.random.PRNGKey(0)
    k_x, k_w, k_b, k_xb = jax.random.split(key, 4)

    bound = 1.0 / np.sqrt(NF)                      # nn.Linear default init bound
    x = jax.random.normal(k_x, (NF, NF), jnp.float32)
    fc_w = jax.random.uniform(k_w, (NF, NF), jnp.float32, -bound, bound)
    fc_b = jax.random.uniform(k_b, (NF,), jnp.float32, -bound, bound)

    param_slab = pack_params(fc_w, fc_b)           # packed once, reused per call

    # Single call (matches the PyTorch module's forward).
    out = forward_pallas(x, param_slab)
    jax.block_until_ready(out)
    ref = forward_ref(x, fc_w, fc_b)
    assert out.shape == (NF, NF)
    assert np.allclose(np.asarray(out), np.asarray(ref), rtol=1e-4, atol=1e-3)

    # Batched call (amortizes launch + keeps weights VMEM-resident).
    xb = jax.random.normal(k_xb, (4, NF, NF), jnp.float32)
    outb = forward_pallas_batched(xb, param_slab)
    jax.block_until_ready(outb)
    refb = jax.vmap(lambda t: forward_ref(t, fc_w, fc_b))(xb)
    assert np.allclose(np.asarray(outb), np.asarray(refb), rtol=1e-4, atol=1e-3)

    print("KERNEL_OK")
</pallas_src>

<mosaic_0001>
module attributes {stable_mosaic.version = 11 : i64} {
  func.func @_kernel(%arg0: i32, %arg1: memref<8x128xf32, #tpu.memory_space<vmem>>, %arg2: memref<136x128xf32, #tpu.memory_space<vmem>>, %arg3: memref<8x128xf32, #tpu.memory_space<vmem>>) attributes {dimension_semantics = [#tpu.dimension_semantics<parallel>], iteration_bounds = array<i64: 1>, scalar_prefetch = 0 : i64, scratch_operands = 0 : i64, tpu.core_type = #tpu.core_type<tc>, window_params = [{transform_indices = @transform_0, window_bounds = array<i64: 8, 128>}, {pipeline_mode = #tpu.pipeline_mode<synchronous>, transform_indices = @transform_1, window_bounds = array<i64: 136, 128>}, {transform_indices = @transform_2, window_bounds = array<i64: 8, 128>}]} {
    %c0 = arith.constant 0 : index
    %c0_0 = arith.constant 0 : index
    %0 = vector.load %arg2[%c0, %c0_0] : memref<136x128xf32, #tpu.memory_space<vmem>>, vector<8x128xf32>
    %c8 = arith.constant 8 : index
    %c0_1 = arith.constant 0 : index
    %1 = vector.load %arg2[%c8, %c0_1] : memref<136x128xf32, #tpu.memory_space<vmem>>, vector<8x128xf32>
    %c16 = arith.constant 16 : index
    %c0_2 = arith.constant 0 : index
    %2 = vector.load %arg2[%c16, %c0_2] : memref<136x128xf32, #tpu.memory_space<vmem>>, vector<8x128xf32>
    %c24 = arith.constant 24 : index
    %c0_3 = arith.constant 0 : index
    %3 = vector.load %arg2[%c24, %c0_3] : memref<136x128xf32, #tpu.memory_space<vmem>>, vector<8x128xf32>
    %c32 = arith.constant 32 : index
    %c0_4 = arith.constant 0 : index
    %4 = vector.load %arg2[%c32, %c0_4] : memref<136x128xf32, #tpu.memory_space<vmem>>, vector<8x128xf32>
    %c48 = arith.constant 48 : index
    %c0_5 = arith.constant 0 : index
    %5 = vector.load %arg2[%c48, %c0_5] : memref<136x128xf32, #tpu.memory_space<vmem>>, vector<8x128xf32>
    %c56 = arith.constant 56 : index
    %c0_6 = arith.constant 0 : index
    %6 = vector.load %arg2[%c56, %c0_6] : memref<136x128xf32, #tpu.memory_space<vmem>>, vector<8x128xf32>
    %c64 = arith.constant 64 : index
    %c0_7 = arith.constant 0 : index
    %7 = vector.load %arg2[%c64, %c0_7] : memref<136x128xf32, #tpu.memory_space<vmem>>, vector<8x128xf32>
    %c72 = arith.constant 72 : index
    %c0_8 = arith.constant 0 : index
    %8 = vector.load %arg2[%c72, %c0_8] : memref<136x128xf32, #tpu.memory_space<vmem>>, vector<8x128xf32>
    %c80 = arith.constant 80 : index
    %c0_9 = arith.constant 0 : index
    %9 = vector.load %arg2[%c80, %c0_9] : memref<136x128xf32, #tpu.memory_space<vmem>>, vector<8x128xf32>
    %c0_10 = arith.constant 0 : index
    %c0_11 = arith.constant 0 : index
    %10 = vector.load %arg1[%c0_10, %c0_11] : memref<8x128xf32, #tpu.memory_space<vmem>>, vector<8x128xf32>
    %c40 = arith.constant 40 : index
    %c0_12 = arith.constant 0 : index
    %11 = vector.load %arg2[%c40, %c0_12] : memref<136x128xf32, #tpu.memory_space<vmem>>, vector<8x128xf32>
    %12 = vector.extract_strided_slice %10 {offsets = [0, 0], sizes = [8, 1], strides = [1, 1]} : vector<8x128xf32> to vector<8x1xf32>
    %13 = vector.broadcast %12 : vector<8x1xf32> to vector<8x128xf32>
    %14 = arith.mulf %13, %0 : vector<8x128xf32>
    %15 = vector.extract_strided_slice %10 {offsets = [0, 1], sizes = [8, 1], strides = [1, 1]} : vector<8x128xf32> to vector<8x1xf32>
    %16 = vector.broadcast %15 : vector<8x1xf32> to vector<8x128xf32>
    %17 = arith.mulf %16, %1 : vector<8x128xf32>
    %18 = vector.extract_strided_slice %10 {offsets = [0, 2], sizes = [8, 1], strides = [1, 1]} : vector<8x128xf32> to vector<8x1xf32>
    %19 = vector.broadcast %18 : vector<8x1xf32> to vector<8x128xf32>
    %20 = arith.mulf %19, %2 : vector<8x128xf32>
    %21 = vector.extract_strided_slice %10 {offsets = [0, 3], sizes = [8, 1], strides = [1, 1]} : vector<8x128xf32> to vector<8x1xf32>
    %22 = vector.broadcast %21 : vector<8x1xf32> to vector<8x128xf32>
    %23 = arith.mulf %22, %3 : vector<8x128xf32>
    %24 = vector.extract_strided_slice %10 {offsets = [0, 4], sizes = [8, 1], strides = [1, 1]} : vector<8x128xf32> to vector<8x1xf32>
    %25 = vector.broadcast %24 : vector<8x1xf32> to vector<8x128xf32>
    %26 = arith.mulf %25, %4 : vector<8x128xf32>
    %27 = arith.addf %11, %14 : vector<8x128xf32>
    %28 = arith.addf %17, %20 : vector<8x128xf32>
    %29 = arith.addf %23, %26 : vector<8x128xf32>
    %30 = arith.addf %28, %29 : vector<8x128xf32>
    %31 = arith.addf %27, %30 : vector<8x128xf32>
    %c88 = arith.constant 88 : index
    %c0_13 = arith.constant 0 : index
    %32 = vector.load %arg2[%c88, %c0_13] : memref<136x128xf32, #tpu.memory_space<vmem>>, vector<8x128xf32>
    %33 = vector.extract_strided_slice %31 {offsets = [0, 0], sizes = [8, 1], strides = [1, 1]} : vector<8x128xf32> to vector<8x1xf32>
    %34 = vector.broadcast %33 : vector<8x1xf32> to vector<8x128xf32>
    %35 = arith.mulf %34, %5 : vector<8x128xf32>
    %36 = vector.extract_strided_slice %31 {offsets = [0, 1], sizes = [8, 1], strides = [1, 1]} : vector<8x128xf32> to vector<8x1xf32>
    %37 = vector.broadcast %36 : vector<8x1xf32> to vector<8x128xf32>
    %38 = arith.mulf %37, %6 : vector<8x128xf32>
    %39 = vector.extract_strided_slice %31 {offsets = [0, 2], sizes = [8, 1], strides = [1, 1]} : vector<8x128xf32> to vector<8x1xf32>
    %40 = vector.broadcast %39 : vector<8x1xf32> to vector<8x128xf32>
    %41 = arith.mulf %40, %7 : vector<8x128xf32>
    %42 = vector.extract_strided_slice %31 {offsets = [0, 3], sizes = [8, 1], strides = [1, 1]} : vector<8x128xf32> to vector<8x1xf32>
    %43 = vector.broadcast %42 : vector<8x1xf32> to vector<8x128xf32>
    %44 = arith.mulf %43, %8 : vector<8x128xf32>
    %45 = vector.extract_strided_slice %31 {offsets = [0, 4], sizes = [8, 1], strides = [1, 1]} : vector<8x128xf32> to vector<8x1xf32>
    %46 = vector.broadcast %45 : vector<8x1xf32> to vector<8x128xf32>
    %47 = arith.mulf %46, %9 : vector<8x128xf32>
    %48 = arith.addf %32, %35 : vector<8x128xf32>
    %49 = arith.addf %38, %41 : vector<8x128xf32>
    %50 = arith.addf %44, %47 : vector<8x128xf32>
    %51 = arith.addf %49, %50 : vector<8x128xf32>
    %52 = arith.addf %48, %51 : vector<8x128xf32>
    %c96 = arith.constant 96 : index
    %c0_14 = arith.constant 0 : index
    %53 = vector.load %arg2[%c96, %c0_14] : memref<136x128xf32, #tpu.memory_space<vmem>>, vector<8x128xf32>
    %54 = vector.extract_strided_slice %52 {offsets = [0, 0], sizes = [8, 1], strides = [1, 1]} : vector<8x128xf32> to vector<8x1xf32>
    %55 = vector.broadcast %54 : vector<8x1xf32> to vector<8x128xf32>
    %56 = arith.mulf %55, %5 : vector<8x128xf32>
    %57 = vector.extract_strided_slice %52 {offsets = [0, 1], sizes = [8, 1], strides = [1, 1]} : vector<8x128xf32> to vector<8x1xf32>
    %58 = vector.broadcast %57 : vector<8x1xf32> to vector<8x128xf32>
    %59 = arith.mulf %58, %6 : vector<8x128xf32>
    %60 = vector.extract_strided_slice %52 {offsets = [0, 2], sizes = [8, 1], strides = [1, 1]} : vector<8x128xf32> to vector<8x1xf32>
    %61 = vector.broadcast %60 : vector<8x1xf32> to vector<8x128xf32>
    %62 = arith.mulf %61, %7 : vector<8x128xf32>
    %63 = vector.extract_strided_slice %52 {offsets = [0, 3], sizes = [8, 1], strides = [1, 1]} : vector<8x128xf32> to vector<8x1xf32>
    %64 = vector.broadcast %63 : vector<8x1xf32> to vector<8x128xf32>
    %65 = arith.mulf %64, %8 : vector<8x128xf32>
    %66 = vector.extract_strided_slice %52 {offsets = [0, 4], sizes = [8, 1], strides = [1, 1]} : vector<8x128xf32> to vector<8x1xf32>
    %67 = vector.broadcast %66 : vector<8x1xf32> to vector<8x128xf32>
    %68 = arith.mulf %67, %9 : vector<8x128xf32>
    %69 = arith.addf %53, %56 : vector<8x128xf32>
    %70 = arith.addf %59, %62 : vector<8x128xf32>
    %71 = arith.addf %65, %68 : vector<8x128xf32>
    %72 = arith.addf %70, %71 : vector<8x128xf32>
    %73 = arith.addf %69, %72 : vector<8x128xf32>
    %c104 = arith.constant 104 : index
    %c0_15 = arith.constant 0 : index
    %74 = vector.load %arg2[%c104, %c0_15] : memref<136x128xf32, #tpu.memory_space<vmem>>, vector<8x128xf32>
    %75 = vector.extract_strided_slice %73 {offsets = [0, 0], sizes = [8, 1], strides = [1, 1]} : vector<8x128xf32> to vector<8x1xf32>
    %76 = vector.broadcast %75 : vector<8x1xf32> to vector<8x128xf32>
    %77 = arith.mulf %76, %5 : vector<8x128xf32>
    %78 = vector.extract_strided_slice %73 {offsets = [0, 1], sizes = [8, 1], strides = [1, 1]} : vector<8x128xf32> to vector<8x1xf32>
    %79 = vector.broadcast %78 : vector<8x1xf32> to vector<8x128xf32>
    %80 = arith.mulf %79, %6 : vector<8x128xf32>
    %81 = vector.extract_strided_slice %73 {offsets = [0, 2], sizes = [8, 1], strides = [1, 1]} : vector<8x128xf32> to vector<8x1xf32>
    %82 = vector.broadcast %81 : vector<8x1xf32> to vector<8x128xf32>
    %83 = arith.mulf %82, %7 : vector<8x128xf32>
    %84 = vector.extract_strided_slice %73 {offsets = [0, 3], sizes = [8, 1], strides = [1, 1]} : vector<8x128xf32> to vector<8x1xf32>
    %85 = vector.broadcast %84 : vector<8x1xf32> to vector<8x128xf32>
    %86 = arith.mulf %85, %8 : vector<8x128xf32>
    %87 = vector.extract_strided_slice %73 {offsets = [0, 4], sizes = [8, 1], strides = [1, 1]} : vector<8x128xf32> to vector<8x1xf32>
    %88 = vector.broadcast %87 : vector<8x1xf32> to vector<8x128xf32>
    %89 = arith.mulf %88, %9 : vector<8x128xf32>
    %90 = arith.addf %74, %77 : vector<8x128xf32>
    %91 = arith.addf %80, %83 : vector<8x128xf32>
    %92 = arith.addf %86, %89 : vector<8x128xf32>
    %93 = arith.addf %91, %92 : vector<8x128xf32>
    %94 = arith.addf %90, %93 : vector<8x128xf32>
    %c112 = arith.constant 112 : index
    %c0_16 = arith.constant 0 : index
    %95 = vector.load %arg2[%c112, %c0_16] : memref<136x128xf32, #tpu.memory_space<vmem>>, vector<8x128xf32>
    %96 = vector.extract_strided_slice %94 {offsets = [0, 0], sizes = [8, 1], strides = [1, 1]} : vector<8x128xf32> to vector<8x1xf32>
    %97 = vector.broadcast %96 : vector<8x1xf32> to vector<8x128xf32>
    %98 = arith.mulf %97, %5 : vector<8x128xf32>
    %99 = vector.extract_strided_slice %94 {offsets = [0, 1], sizes = [8, 1], strides = [1, 1]} : vector<8x128xf32> to vector<8x1xf32>
    %100 = vector.broadcast %99 : vector<8x1xf32> to vector<8x128xf32>
    %101 = arith.mulf %100, %6 : vector<8x128xf32>
    %102 = vector.extract_strided_slice %94 {offsets = [0, 2], sizes = [8, 1], strides = [1, 1]} : vector<8x128xf32> to vector<8x1xf32>
    %103 = vector.broadcast %102 : vector<8x1xf32> to vector<8x128xf32>
    %104 = arith.mulf %103, %7 : vector<8x128xf32>
    %105 = vector.extract_strided_slice %94 {offsets = [0, 3], sizes = [8, 1], strides = [1, 1]} : vector<8x128xf32> to vector<8x1xf32>
    %106 = vector.broadcast %105 : vector<8x1xf32> to vector<8x128xf32>
    %107 = arith.mulf %106, %8 : vector<8x128xf32>
    %108 = vector.extract_strided_slice %94 {offsets = [0, 4], sizes = [8, 1], strides = [1, 1]} : vector<8x128xf32> to vector<8x1xf32>
    %109 = vector.broadcast %108 : vector<8x1xf32> to vector<8x128xf32>
    %110 = arith.mulf %109, %9 : vector<8x128xf32>
    %111 = arith.addf %95, %98 : vector<8x128xf32>
    %112 = arith.addf %101, %104 : vector<8x128xf32>
    %113 = arith.addf %107, %110 : vector<8x128xf32>
    %114 = arith.addf %112, %113 : vector<8x128xf32>
    %115 = arith.addf %111, %114 : vector<8x128xf32>
    %c120 = arith.constant 120 : index
    %c0_17 = arith.constant 0 : index
    %116 = vector.load %arg2[%c120, %c0_17] : memref<136x128xf32, #tpu.memory_space<vmem>>, vector<8x128xf32>
    %117 = vector.extract_strided_slice %115 {offsets = [0, 0], sizes = [8, 1], strides = [1, 1]} : vector<8x128xf32> to vector<8x1xf32>
    %118 = vector.broadcast %117 : vector<8x1xf32> to vector<8x128xf32>
    %119 = arith.mulf %118, %5 : vector<8x128xf32>
    %120 = vector.extract_strided_slice %115 {offsets = [0, 1], sizes = [8, 1], strides = [1, 1]} : vector<8x128xf32> to vector<8x1xf32>
    %121 = vector.broadcast %120 : vector<8x1xf32> to vector<8x128xf32>
    %122 = arith.mulf %121, %6 : vector<8x128xf32>
    %123 = vector.extract_strided_slice %115 {offsets = [0, 2], sizes = [8, 1], strides = [1, 1]} : vector<8x128xf32> to vector<8x1xf32>
    %124 = vector.broadcast %123 : vector<8x1xf32> to vector<8x128xf32>
    %125 = arith.mulf %124, %7 : vector<8x128xf32>
    %126 = vector.extract_strided_slice %115 {offsets = [0, 3], sizes = [8, 1], strides = [1, 1]} : vector<8x128xf32> to vector<8x1xf32>
    %127 = vector.broadcast %126 : vector<8x1xf32> to vector<8x128xf32>
    %128 = arith.mulf %127, %8 : vector<8x128xf32>
    %129 = vector.extract_strided_slice %115 {offsets = [0, 4], sizes = [8, 1], strides = [1, 1]} : vector<8x128xf32> to vector<8x1xf32>
    %130 = vector.broadcast %129 : vector<8x1xf32> to vector<8x128xf32>
    %131 = arith.mulf %130, %9 : vector<8x128xf32>
    %132 = arith.addf %116, %119 : vector<8x128xf32>
    %133 = arith.addf %122, %125 : vector<8x128xf32>
    %134 = arith.addf %128, %131 : vector<8x128xf32>
    %135 = arith.addf %133, %134 : vector<8x128xf32>
    %136 = arith.addf %132, %135 : vector<8x128xf32>
    %c128 = arith.constant 128 : index
    %c0_18 = arith.constant 0 : index
    %137 = vector.load %arg2[%c128, %c0_18] : memref<136x128xf32, #tpu.memory_space<vmem>>, vector<8x128xf32>
    %138 = vector.extract_strided_slice %136 {offsets = [0, 0], sizes = [8, 1], strides = [1, 1]} : vector<8x128xf32> to vector<8x1xf32>
    %139 = vector.broadcast %138 : vector<8x1xf32> to vector<8x128xf32>
    %140 = arith.mulf %139, %5 : vector<8x128xf32>
    %141 = vector.extract_strided_slice %136 {offsets = [0, 1], sizes = [8, 1], strides = [1, 1]} : vector<8x128xf32> to vector<8x1xf32>
    %142 = vector.broadcast %141 : vector<8x1xf32> to vector<8x128xf32>
    %143 = arith.mulf %142, %6 : vector<8x128xf32>
    %144 = vector.extract_strided_slice %136 {offsets = [0, 2], sizes = [8, 1], strides = [1, 1]} : vector<8x128xf32> to vector<8x1xf32>
    %145 = vector.broadcast %144 : vector<8x1xf32> to vector<8x128xf32>
    %146 = arith.mulf %145, %7 : vector<8x128xf32>
    %147 = vector.extract_strided_slice %136 {offsets = [0, 3], sizes = [8, 1], strides = [1, 1]} : vector<8x128xf32> to vector<8x1xf32>
    %148 = vector.broadcast %147 : vector<8x1xf32> to vector<8x128xf32>
    %149 = arith.mulf %148, %8 : vector<8x128xf32>
    %150 = vector.extract_strided_slice %136 {offsets = [0, 4], sizes = [8, 1], strides = [1, 1]} : vector<8x128xf32> to vector<8x1xf32>
    %151 = vector.broadcast %150 : vector<8x1xf32> to vector<8x128xf32>
    %152 = arith.mulf %151, %9 : vector<8x128xf32>
    %153 = arith.addf %137, %140 : vector<8x128xf32>
    %154 = arith.addf %143, %146 : vector<8x128xf32>
    %155 = arith.addf %149, %152 : vector<8x128xf32>
    %156 = arith.addf %154, %155 : vector<8x128xf32>
    %157 = arith.addf %153, %156 : vector<8x128xf32>
    %c0_19 = arith.constant 0 : index
    %c0_20 = arith.constant 0 : index
    %158 = vector.load %arg3[%c0_19, %c0_20] : memref<8x128xf32, #tpu.memory_space<vmem>>, vector<8x128xf32>
    tpu.vector_store %arg3[%c0_19, %c0_20], %157 {strides = array<i32>} : memref<8x128xf32, #tpu.memory_space<vmem>>, vector<8x128xf32>,
    return
  }
  func.func @transform_0(%arg0: i32) -> (i32, i32) {
    %c0_i32 = arith.constant 0 : i32
    %c0_i32_0 = arith.constant 0 : i32
    return %arg0, %c0_i32 : i32, i32
  }
  func.func @transform_1(%arg0: i32) -> (i32, i32) {
    %c0_i32 = arith.constant 0 : i32
    %c0_i32_0 = arith.constant 0 : i32
    %c0_i32_1 = arith.constant 0 : i32
    return %c0_i32, %c0_i32_0 : i32, i32
  }
  func.func @transform_2(%arg0: i32) -> (i32, i32) {
    %c0_i32 = arith.constant 0 : i32
    %c0_i32_0 = arith.constant 0 : i32
    return %arg0, %c0_i32 : i32, i32
  }
}

</mosaic_0001>

<llo_original>
// kernel: tpu_custom_call.1
$region0: #{tpu_custom_call.1}
  #allocation0 [shape = 'u32[]', space=smem, size = 0x4, offset = 0x4, fixed_abs, tag = 'smem constant byte address 0x4 - core index']
  #allocation1 [shape = 'u32[144,128]{1,0:T(1,128)}', space=vmem, size = 0x12000, scoped, tag = 'internal scratch']
  %s0 = inlined_call_operand.hbm [shape: f32[8,128], index: 0, kind: input, shape index: {}]
  %s1 = inlined_call_operand.hbm [shape: f32[136,128], index: 1, kind: input, shape index: {}]
  %s2 = inlined_call_operand.hbm [shape: f32[8,128], index: 2, kind: output, shape index: {}]
  %s3 = sld [smem:[#allocation0]]
  $region26: #{tpu_custom_call.1} parent=0
    _
  %s5 = ssub.s32 1, %s3
  %s6 = scalar_select 0, %s5, %s3
  $region1: #{tpu_custom_call.1} parent=0
    #allocation2 [shape = 'u8[4096]{0}', space=vmem, size = 0x1000, scoped, tag = 'input window, operand 0, single buffered']
    #allocation3 [shape = 's32[1]{0}', space=sflag, size = 0x4, scoped, tag = 'scoped memory for tpu_custom_call.1']
    #allocation4 [shape = 's32[1]{0}', space=sflag, size = 0x4, scoped, tag = 'scoped memory for tpu_custom_call.1']
    #allocation5 [shape = 'u8[69632]{0}', space=vmem, size = 0x11000, scoped, tag = 'input window, operand 1, single buffered']
    #allocation6 [shape = 's32[1]{0}', space=sflag, size = 0x4, scoped, tag = 'scoped memory for tpu_custom_call.1']
    #allocation7 [shape = 'u8[4096]{0}', space=vmem, size = 0x1000, scoped, tag = 'output window, operand 0, single buffered']
    %7 = vsyncpa [#allocation3], 0
    %8 = vsyncpa [#allocation6], 0
    %9 = vsyncpa [#allocation4], 0
    // Predicated region
    $region2: #{tpu_custom_call.1} parent=1 // pred_check
      _
    $region3: #{tpu_custom_call.1} parent=1 // pred_check_branch
      %11 = sbr.rel (0) target = $region5
    $region4: #{tpu_custom_call.1} parent=1 // pred_region
      %s13 = ssub.s32 128, 128
      %14 = vsyncadd [#allocation3], %s13
      %s16 = sshll.u32 [#allocation2], 4
      %s17 = int_to_ptr.vmem [resolvable:$true] %s16
      %19 = dma.hbm_to_vmem [thread:$0]  %s0, 128, %s17, [#allocation3]
    $region5: #{tpu_custom_call.1} parent=1 // pred_fallthru
      _
    // Predicated region
    $region6: #{tpu_custom_call.1} parent=1 // pred_check
      _
    $region7: #{tpu_custom_call.1} parent=1 // pred_check_branch
      %21 = sbr.rel (0) target = $region9
    $region8: #{tpu_custom_call.1} parent=1 // pred_region
      %s23 = ssub.s32 2176, 2176
      %24 = vsyncadd [#allocation6], %s23
      %s25 = sshll.u32 [#allocation5], 4
      %s26 = int_to_ptr.vmem [resolvable:$true] %s25
      %31 = dma.hbm_to_vmem [thread:$0]  %s1, 2176, %s26, [#allocation6], 128, 128, 8
    $region9: #{tpu_custom_call.1} parent=1 // pred_fallthru
      _
    // Predicated region
    $region10: #{tpu_custom_call.1} parent=1 // pred_check
      _
    $region11: #{tpu_custom_call.1} parent=1 // pred_check_branch
      %33 = sbr.rel (0) target = $region13
    $region12: #{tpu_custom_call.1} parent=1 // pred_region
      %34 = dma.done [#allocation3], 128
    $region13: #{tpu_custom_call.1} parent=1 // pred_fallthru
      _
    // Predicated region
    $region14: #{tpu_custom_call.1} parent=1 // pred_check
      _
    $region15: #{tpu_custom_call.1} parent=1 // pred_check_branch
      %36 = sbr.rel (0) target = $region17
    $region16: #{tpu_custom_call.1} parent=1 // pred_region
      %37 = dma.done [#allocation6], 2176
    $region17: #{tpu_custom_call.1} parent=1 // pred_fallthru
      _
    %v38 = vld [vmem:[#allocation5] sm:$0xff]
    %v39 = vld [vmem:[#allocation5 + $0x8] sm:$0xff]
    %v40 = vld [vmem:[#allocation5 + $0x10] sm:$0xff]
    %v41 = vld [vmem:[#allocation5 + $0x18] sm:$0xff]
    %v42 = vld [vmem:[#allocation5 + $0x20] sm:$0xff]
    %v43 = vld [vmem:[#allocation5 + $0x30] sm:$0xff]
    %v44 = vld [vmem:[#allocation5 + $0x38] sm:$0xff]
    %v45 = vld [vmem:[#allocation5 + $0x40] sm:$0xff]
    %v46 = vld [vmem:[#allocation5 + $0x48] sm:$0xff]
    %v47 = vld [vmem:[#allocation5 + $0x50] sm:$0xff]
    %v48 = vld [vmem:[#allocation2] sm:$0xff]
    %v49 = vld [vmem:[#allocation5 + $0x28] sm:$0xff]
    %51 = vset.pattern.permute.xlu0 0
    %52 = vperm.xlu0 %51, %v48
    %v53 = vpop.permute.xlu0 %52
    %v55 = vmul.f32 %v53, %v38
    %56 = vset.pattern.permute.xlu0 1
    %57 = vperm.xlu0 %56, %v48
    %v58 = vpop.permute.xlu0 %57
    %v60 = vmul.f32 %v58, %v39
    %61 = vset.pattern.permute.xlu0 2
    %62 = vperm.xlu0 %61, %v48
    %v63 = vpop.permute.xlu0 %62
    %v65 = vmul.f32 %v63, %v40
    %66 = vset.pattern.permute.xlu0 3
    %67 = vperm.xlu0 %66, %v48
    %v68 = vpop.permute.xlu0 %67
    %v70 = vmul.f32 %v68, %v41
    %71 = vset.pattern.permute.xlu0 4
    %72 = vperm.xlu0 %71, %v48
    %v73 = vpop.permute.xlu0 %72
    %v75 = vmul.f32 %v73, %v42
    %v76 = vadd.f32 %v49, %v55
    %v77 = vadd.f32 %v60, %v65
    %v78 = vadd.f32 %v70, %v75
    %v79 = vadd.f32 %v77, %v78
    %v80 = vadd.f32 %v76, %v79
    %v81 = vld [vmem:[#allocation5 + $0x58] sm:$0xff]
    %83 = vset.pattern.permute.xlu0 0
    %84 = vperm.xlu0 %83, %v80
    %v85 = vpop.permute.xlu0 %84
    %v87 = vmul.f32 %v85, %v43
    %88 = vset.pattern.permute.xlu0 1
    %89 = vperm.xlu0 %88, %v80
    %v90 = vpop.permute.xlu0 %89
    %v92 = vmul.f32 %v90, %v44
    %93 = vset.pattern.permute.xlu0 2
    %94 = vperm.xlu0 %93, %v80
    %v95 = vpop.permute.xlu0 %94
    %v97 = vmul.f32 %v95, %v45
    %98 = vset.pattern.permute.xlu0 3
    %99 = vperm.xlu0 %98, %v80
    %v100 = vpop.permute.xlu0 %99
    %v102 = vmul.f32 %v100, %v46
    %103 = vset.pattern.permute.xlu0 4
    %104 = vperm.xlu0 %103, %v80
    %v105 = vpop.permute.xlu0 %104
    %v107 = vmul.f32 %v105, %v47
    %v108 = vadd.f32 %v81, %v87
    %v109 = vadd.f32 %v92, %v97
    %v110 = vadd.f32 %v102, %v107
    %v111 = vadd.f32 %v109, %v110
    %v112 = vadd.f32 %v108, %v111
    %v113 = vld [vmem:[#allocation5 + $0x60] sm:$0xff]
    %115 = vset.pattern.permute.xlu0 0
    %116 = vperm.xlu0 %115, %v112
    %v117 = vpop.permute.xlu0 %116
    %v119 = vmul.f32 %v117, %v43
    %120 = vset.pattern.permute.xlu0 1
    %121 = vperm.xlu0 %120, %v112
    %v122 = vpop.permute.xlu0 %121
    %v124 = vmul.f32 %v122, %v44
    %125 = vset.pattern.permute.xlu0 2
    %126 = vperm.xlu0 %125, %v112
    %v127 = vpop.permute.xlu0 %126
    %v129 = vmul.f32 %v127, %v45
    %130 = vset.pattern.permute.xlu0 3
    %131 = vperm.xlu0 %130, %v112
    %v132 = vpop.permute.xlu0 %131
    %v134 = vmul.f32 %v132, %v46
    %135 = vset.pattern.permute.xlu0 4
    %136 = vperm.xlu0 %135, %v112
    %v137 = vpop.permute.xlu0 %136
    %v139 = vmul.f32 %v137, %v47
    %v140 = vadd.f32 %v113, %v119
    %v141 = vadd.f32 %v124, %v129
    %v142 = vadd.f32 %v134, %v139
    %v143 = vadd.f32 %v141, %v142
    %v144 = vadd.f32 %v140, %v143
    %v145 = vld [vmem:[#allocation5 + $0x68] sm:$0xff]
    %147 = vset.pattern.permute.xlu0 0
    %148 = vperm.xlu0 %147, %v144
    %v149 = vpop.permute.xlu0 %148
    %v151 = vmul.f32 %v149, %v43
    %152 = vset.pattern.permute.xlu0 1
    %153 = vperm.xlu0 %152, %v144
    %v154 = vpop.permute.xlu0 %153
    %v156 = vmul.f32 %v154, %v44
    %157 = vset.pattern.permute.xlu0 2
    %158 = vperm.xlu0 %157, %v144
    %v159 = vpop.permute.xlu0 %158
    %v161 = vmul.f32 %v159, %v45
    %162 = vset.pattern.permute.xlu0 3
    %163 = vperm.xlu0 %162, %v144
    %v164 = vpop.permute.xlu0 %163
    %v166 = vmul.f32 %v164, %v46
    %167 = vset.pattern.permute.xlu0 4
    %168 = vperm.xlu0 %167, %v144
    %v169 = vpop.permute.xlu0 %168
    %v171 = vmul.f32 %v169, %v47
    %v172 = vadd.f32 %v145, %v151
    %v173 = vadd.f32 %v156, %v161
    %v174 = vadd.f32 %v166, %v171
    %v175 = vadd.f32 %v173, %v174
    %v176 = vadd.f32 %v172, %v175
    %v177 = vld [vmem:[#allocation5 + $0x70] sm:$0xff]
    %179 = vset.pattern.permute.xlu0 0
    %180 = vperm.xlu0 %179, %v176
    %v181 = vpop.permute.xlu0 %180
    %v183 = vmul.f32 %v181, %v43
    %184 = vset.pattern.permute.xlu0 1
    %185 = vperm.xlu0 %184, %v176
    %v186 = vpop.permute.xlu0 %185
    %v188 = vmul.f32 %v186, %v44
    %189 = vset.pattern.permute.xlu0 2
    %190 = vperm.xlu0 %189, %v176
    %v191 = vpop.permute.xlu0 %190
    %v193 = vmul.f32 %v191, %v45
    %194 = vset.pattern.permute.xlu0 3
    %195 = vperm.xlu0 %194, %v176
    %v196 = vpop.permute.xlu0 %195
    %v198 = vmul.f32 %v196, %v46
    %199 = vset.pattern.permute.xlu0 4
    %200 = vperm.xlu0 %199, %v176
    %v201 = vpop.permute.xlu0 %200
    %v203 = vmul.f32 %v201, %v47
    %v204 = vadd.f32 %v177, %v183
    %v205 = vadd.f32 %v188, %v193
    %v206 = vadd.f32 %v198, %v203
    %v207 = vadd.f32 %v205, %v206
    %v208 = vadd.f32 %v204, %v207
    %v209 = vld [vmem:[#allocation5 + $0x78] sm:$0xff]
    %211 = vset.pattern.permute.xlu0 0
    %212 = vperm.xlu0 %211, %v208
    %v213 = vpop.permute.xlu0 %212
    %v215 = vmul.f32 %v213, %v43
    %216 = vset.pattern.permute.xlu0 1
    %217 = vperm.xlu0 %216, %v208
    %v218 = vpop.permute.xlu0 %217
    %v220 = vmul.f32 %v218, %v44
    %221 = vset.pattern.permute.xlu0 2
    %222 = vperm.xlu0 %221, %v208
    %v223 = vpop.permute.xlu0 %222
    %v225 = vmul.f32 %v223, %v45
    %226 = vset.pattern.permute.xlu0 3
    %227 = vperm.xlu0 %226, %v208
    %v228 = vpop.permute.xlu0 %227
    %v230 = vmul.f32 %v228, %v46
    %231 = vset.pattern.permute.xlu0 4
    %232 = vperm.xlu0 %231, %v208
    %v233 = vpop.permute.xlu0 %232
    %v235 = vmul.f32 %v233, %v47
    %v236 = vadd.f32 %v209, %v215
    %v237 = vadd.f32 %v220, %v225
    %v238 = vadd.f32 %v230, %v235
    %v239 = vadd.f32 %v237, %v238
    %v240 = vadd.f32 %v236, %v239
    %v241 = vld [vmem:[#allocation5 + $0x80] sm:$0xff]
    %243 = vset.pattern.permute.xlu0 0
    %244 = vperm.xlu0 %243, %v240
    %v245 = vpop.permute.xlu0 %244
    %v247 = vmul.f32 %v245, %v43
    %248 = vset.pattern.permute.xlu0 1
    %249 = vperm.xlu0 %248, %v240
    %v250 = vpop.permute.xlu0 %249
    %v252 = vmul.f32 %v250, %v44
    %253 = vset.pattern.permute.xlu0 2
    %254 = vperm.xlu0 %253, %v240
    %v255 = vpop.permute.xlu0 %254
    %v257 = vmul.f32 %v255, %v45
    %258 = vset.pattern.permute.xlu0 3
    %259 = vperm.xlu0 %258, %v240
    %v260 = vpop.permute.xlu0 %259
    %v262 = vmul.f32 %v260, %v46
    %263 = vset.pattern.permute.xlu0 4
    %264 = vperm.xlu0 %263, %v240
    %v265 = vpop.permute.xlu0 %264
    %v267 = vmul.f32 %v265, %v47
    %v268 = vadd.f32 %v241, %v247
    %v269 = vadd.f32 %v252, %v257
    %v270 = vadd.f32 %v262, %v267
    %v271 = vadd.f32 %v269, %v270
    %v272 = vadd.f32 %v268, %v271
    %273 = vst [vmem:[#allocation7] sm:$0xff] %v272
    // Predicated region
    $region18: #{tpu_custom_call.1} parent=1 // pred_check
      _
    $region19: #{tpu_custom_call.1} parent=1 // pred_check_branch
      %275 = sbr.rel (0) target = $region21
    $region20: #{tpu_custom_call.1} parent=1 // pred_region
      %s277 = ssub.s32 128, 128
      %278 = vsyncadd [#allocation4], %s277
      %s280 = sshll.u32 [#allocation7], 4
      %s281 = int_to_ptr.vmem [resolvable:$true] %s280
      %283 = dma.vmem_to_hbm [thread:$0]  %s281, 128, %s2, [#allocation4]
    $region21: #{tpu_custom_call.1} parent=1 // pred_fallthru
      _
    // Predicated region
    $region22: #{tpu_custom_call.1} parent=1 // pred_check
      _
    $region23: #{tpu_custom_call.1} parent=1 // pred_check_branch
      %285 = sbr.rel (0) target = $region25
    $region24: #{tpu_custom_call.1} parent=1 // pred_region
      %286 = dma.done [#allocation4], 128
    $region25: #{tpu_custom_call.1} parent=1 // pred_fallthru
      _
    %287 = vsyncpa [#allocation3], 1
    %288 = vsyncpa [#allocation6], 1
    %289 = vsyncpa [#allocation4], 1

</llo_original>
